<compile_context>
chip_gen: v7x
topology: tpu7x:2x2x1
jax: 0.10.0
libtpu: 0.0.40
codegen_flags: <defaults>
</compile_context>

<pallas_src>
import math
import jax
import jax.numpy as jnp
import numpy as np
from jax.experimental import pallas as pl
from jax.experimental.pallas import tpu as pltpu


LANE = 128      # TPU lane width; embedding / feature dims padded to this


# ---------------------------------------------------------------------------
# helpers
# ---------------------------------------------------------------------------
def _round_up(x, m):
    return ((x + m - 1) // m) * m


def _row_step(dtype):
    # sublane packing: bf16 packs 16 rows per (8,128) f32-equivalent tile
    return 16 if jnp.dtype(dtype).itemsize < 4 else 8


def _pick_tile(n_pad, limit, step):
    """Largest multiple of `step` that is <= limit and divides n_pad."""
    t = min(limit, n_pad)
    t = max((t // step) * step, step)
    while n_pad % t != 0:
        t -= step
    return t


def _pad2d(x, rows, cols):
    r, c = x.shape
    if r == rows and c == cols:
        return x
    return jnp.pad(x, ((0, rows - r), (0, cols - c)))


def _vmem_limit(tile_bytes):
    """Scoped VMEM limit: tiles + slack, capped per-generation."""
    try:
        cap = pltpu.get_tpu_info().vmem_capacity_bytes
    except Exception:
        cap = 64 << 20          # conservative fallback (v7x-sized)
    cap_limit = int(cap * 0.75)   # ~96 MiB on v5e/v6e, ~48 MiB on v7x
    return int(min(max(tile_bytes + (4 << 20), 16 << 20), cap_limit))


# ---------------------------------------------------------------------------
# Fused hop kernel:  out = tanh( (A_norm @ H) @ W^T + b )
#   grid = (dst tiles, src/reduction tiles)  -- reduction axis last
#   f32 VMEM accumulator; init at k==0; weight-matmul + bias + tanh + store
#   epilogue at k==last.  W^T and bias are VMEM-resident (index_map -> (0,0)).
# ---------------------------------------------------------------------------
def _gcn_hop_kernel(adj_ref, h_ref, wt_ref, b_ref, out_ref, acc_ref):
    k = pl.program_id(1)

    @pl.when(k == 0)
    def _init():
        acc_ref[...] = jnp.zeros_like(acc_ref)

    acc_ref[...] += jnp.dot(adj_ref[...], h_ref[...],
                            preferred_element_type=jnp.float32)

    @pl.when(k == pl.num_programs(1) - 1)
    def _finish():
        # small (tm x E_pad x E_pad) epilogue matmul on the resident W^T,
        # then f32 bias-add + tanh (v5e VPU/EUP have no bf16 path).
        z = jnp.dot(acc_ref[...].astype(wt_ref.dtype), wt_ref[...],
                    preferred_element_type=jnp.float32) + b_ref[...]
        out_ref[...] = jnp.tanh(z).astype(out_ref.dtype)


def gcn_hop(adj_pad, h_pad, wt_pad, b_pad, *, tm, tk, out_dtype):
    n_dst, n_src = adj_pad.shape
    e_pad = h_pad.shape[1]
    ib = jnp.dtype(adj_pad.dtype).itemsize
    tm_e = _pick_tile(n_dst, tm, _row_step(adj_pad.dtype))
    tk_e = _pick_tile(n_src, tk, LANE)
    # double-buffered inputs/outputs + single f32 accumulator scratch
    tile_bytes = (2 * (tm_e * tk_e + tk_e * e_pad + e_pad * e_pad) * ib
                  + 2 * e_pad * 4
                  + 2 * tm_e * e_pad * jnp.dtype(out_dtype).itemsize
                  + tm_e * e_pad * 4)
    return pl.pallas_call(
        _gcn_hop_kernel,
        out_shape=jax.ShapeDtypeStruct((n_dst, e_pad), out_dtype),
        grid_spec=pltpu.PrefetchScalarGridSpec(
            num_scalar_prefetch=0,
            grid=(n_dst // tm_e, n_src // tk_e),
            in_specs=[
                pl.BlockSpec((tm_e, tk_e), lambda i, k: (i, k)),   # adjacency tile
                pl.BlockSpec((tk_e, e_pad), lambda i, k: (k, 0)),  # H tile
                pl.BlockSpec((e_pad, e_pad), lambda i, k: (0, 0)),  # W^T, resident
                pl.BlockSpec((1, e_pad), lambda i, k: (0, 0)),      # bias, resident
            ],
            out_specs=pl.BlockSpec((tm_e, e_pad), lambda i, k: (i, 0)),
            scratch_shapes=[pltpu.VMEM((tm_e, e_pad), jnp.float32)],
        ),
        compiler_params=pltpu.CompilerParams(
            dimension_semantics=("parallel", "arbitrary"),
            vmem_limit_bytes=_vmem_limit(tile_bytes)),
    )(adj_pad, h_pad, wt_pad, b_pad)


# ---------------------------------------------------------------------------
# Scoring head
#   score_interaction = sum(user * item, -1)      (broadcast to 128 lanes)
#   score_feature     = item @ Wf^T + bf          (feature dim padded to 128)
# TODO(synk): at production batch sizes pack si into spare lanes of sf (or skip
#   the Pallas head entirely); at B*K=8 the 128x store amplification is noise.
# ---------------------------------------------------------------------------
def _score_kernel(user_ref, item_ref, wft_ref, bf_ref, si_ref, sf_ref):
    u = user_ref[...].astype(jnp.float32)
    it = item_ref[...].astype(jnp.float32)
    s = jnp.sum(u * it, axis=-1, keepdims=True)            # XLU reduce (cheap)
    si_ref[...] = jnp.broadcast_to(s, si_ref.shape)          # lane-dense store
    sf_ref[...] = (jnp.dot(item_ref[...], wft_ref[...],
                           preferred_element_type=jnp.float32)
                   + bf_ref[...])


def score_head(user, item, wft_pad, bf_pad, *, n_feature, tile_rows=256):
    # user/item: [B, K, E_pad]
    b, k, e_pad = user.shape
    bk = b * k
    nf_pad = wft_pad.shape[1]
    step = 16                                   # safe for both f32 and bf16 rows
    bk_pad = _round_up(bk, step)
    u2 = _pad2d(user.reshape(bk, e_pad), bk_pad, e_pad)
    i2 = _pad2d(item.reshape(bk, e_pad), bk_pad, e_pad)
    tr = _pick_tile(bk_pad, tile_rows, step)
    bf2 = bf_pad.reshape(1, nf_pad).astype(jnp.float32)
    ib = jnp.dtype(user.dtype).itemsize
    tile_bytes = (2 * (2 * tr * e_pad + e_pad * nf_pad) * ib
                  + 2 * (tr * LANE + tr * nf_pad + nf_pad) * 4)
    si, sf = pl.pallas_call(
        _score_kernel,
        out_shape=(
            jax.ShapeDtypeStruct((bk_pad, LANE), jnp.float32),
            jax.ShapeDtypeStruct((bk_pad, nf_pad), jnp.float32),
        ),
        grid_spec=pltpu.PrefetchScalarGridSpec(
            num_scalar_prefetch=0,
            grid=(bk_pad // tr,),
            in_specs=[
                pl.BlockSpec((tr, e_pad), lambda i: (i, 0)),
                pl.BlockSpec((tr, e_pad), lambda i: (i, 0)),
                pl.BlockSpec((e_pad, nf_pad), lambda i: (0, 0)),
                pl.BlockSpec((1, nf_pad), lambda i: (0, 0)),
            ],
            out_specs=[
                pl.BlockSpec((tr, LANE), lambda i: (i, 0)),
                pl.BlockSpec((tr, nf_pad), lambda i: (i, 0)),
            ],
        ),
        compiler_params=pltpu.CompilerParams(
            dimension_semantics=("parallel",),
            vmem_limit_bytes=_vmem_limit(tile_bytes)),
    )(u2, i2, wft_pad, bf2)
    si = si[:bk, 0].reshape(b, k)
    sf = sf[:bk, :n_feature].reshape(b, k, n_feature)
    return si, sf


# ---------------------------------------------------------------------------
# Model glue (plain JAX): parameter init, padding, hop loop, gathers
# ---------------------------------------------------------------------------
def init_params(key, num_nodes, embedding_size, hop, n_feature):
    stdv = 1.0 / math.sqrt(embedding_size)
    keys = jax.random.split(key, 2 * hop + 3)
    params = {}
    params["embeddings"] = jax.random.uniform(
        keys[0], (num_nodes, embedding_size), jnp.float32, -stdv, stdv)
    params["layer_w"] = []
    params["layer_b"] = []
    bound = 1.0 / math.sqrt(embedding_size)
    for i in range(hop):
        params["layer_w"].append(jax.random.uniform(
            keys[1 + 2 * i], (embedding_size, embedding_size),
            jnp.float32, -bound, bound))
        params["layer_b"].append(jax.random.uniform(
            keys[2 + 2 * i], (embedding_size,), jnp.float32, -bound, bound))
    params["fc_w"] = jax.random.uniform(
        keys[-2], (n_feature, embedding_size), jnp.float32, -bound, bound)
    params["fc_b"] = jax.random.uniform(
        keys[-1], (n_feature,), jnp.float32, -bound, bound)
    return params


def encode(params, adj_norm, feature_ids, hop, *,
           tm=512, tk=4096, compute_dtype=jnp.bfloat16):
    """Returns (h_pad [N_pad, E_pad], n_valid, e_pad)."""
    e = params["embeddings"].shape[1]
    e_pad = _round_up(e, LANE)
    n_dst, n_src = adj_norm.shape
    assert n_dst == n_src, "dense NodeFlow glue assumes a square block adjacency"
    n = n_dst
    n_pad = _round_up(n, LANE)          # multiple of 128 -> any tile fits

    adj_pad = _pad2d(adj_norm, n_pad, n_pad).astype(compute_dtype)
    h = params["embeddings"][feature_ids]                 # nf.layers[0] activation
    h_pad = _pad2d(h, n_pad, e_pad).astype(compute_dtype)

    for i in range(hop):
        # dropout p=0.0 / eval -> identity.
        w = params["layer_w"][i]
        b = params["layer_b"][i]
        # zero-pad W to (E_pad, E_pad); padded rows/cols contribute exactly 0
        wt_pad = _pad2d(w, e_pad, e_pad).T.astype(compute_dtype)   # (E_in, E_out)
        b_pad = jnp.pad(b, (0, e_pad - e)).reshape(1, e_pad).astype(jnp.float32)
        # fused hop: tanh( (A @ H) @ W^T + b ), output emitted in compute_dtype
        h_pad = gcn_hop(adj_pad, h_pad, wt_pad, b_pad,
                        tm=tm, tk=tk, out_dtype=compute_dtype)
    return h_pad, n, e_pad


def div_dgl_gcn_forward(params, adj_norm, feature_ids, user_index, item_index,
                        hop, *, tm=512, tk=4096, compute_dtype=jnp.bfloat16):
    h_pad, n, e_pad = encode(params, adj_norm, feature_ids, hop,
                             tm=tm, tk=tk, compute_dtype=compute_dtype)
    user = h_pad[user_index]          # [B, K, E_pad]; indices < n, pads unused
    item = h_pad[item_index]          # [B, K, E_pad]

    n_feature = params["fc_w"].shape[0]
    nf_pad = _round_up(n_feature, LANE)
    wft_pad = _pad2d(params["fc_w"], nf_pad, e_pad).T.astype(compute_dtype)
    bf_pad = jnp.pad(params["fc_b"], (0, nf_pad - n_feature))

    score_interaction, score_feature = score_head(
        user, item, wft_pad, bf_pad, n_feature=n_feature)
    # gradient-reversal hook on item_feature is backward-only; forward unchanged
    return score_interaction, score_feature


# ---------------------------------------------------------------------------
if __name__ == "__main__":
    # deterministic synthetic config; large enough that the (dst, src) grid has
    # multiple tiles in both axes when small tiles are forced below
    n_user, n_item = 150, 150
    num_nodes = n_user + n_item          # 300 -> padded to 384
    embedding_size = 32                  # padded to 128 lanes inside kernels
    hop = 2
    n_feature = 8                        # padded to 128 lanes in the score head
    B, K = 2, 4

    key = jax.random.PRNGKey(0)
    k_param, k_adj, k_u, k_i = jax.random.split(key, 4)

    params = init_params(k_param, num_nodes, embedding_size, hop, n_feature)

    # synthetic NodeFlow block graph: random edges + self loops, mean-normalized
    adj = jax.random.bernoulli(
        k_adj, 0.05, (num_nodes, num_nodes)).astype(jnp.float32)
    adj = jnp.maximum(adj, jnp.eye(num_nodes, dtype=jnp.float32))
    adj_norm = adj / jnp.sum(adj, axis=1, keepdims=True)   # mean aggregation

    feature_ids = jnp.arange(num_nodes, dtype=jnp.int32)
    user_index = jax.random.randint(k_u, (B, K), 0, n_user)
    item_index = jax.random.randint(k_i, (B, K), n_user, num_nodes)

    # pure-JAX reference
    h_ref = params["embeddings"][feature_ids]
    for i in range(hop):
        h_ref = jnp.tanh(
            (adj_norm @ h_ref) @ params["layer_w"][i].T + params["layer_b"][i])
    u_ref = h_ref[user_index]
    it_ref = h_ref[item_index]
    si_ref = jnp.sum(u_ref * it_ref, axis=2)
    sf_ref = it_ref @ params["fc_w"].T + params["fc_b"]

    # 1) float32 path with small tiles -> exercises the multi-tile reduction
    #    grid (accumulator init / epilogue across several k steps); tight check.
    si_f32, sf_f32 = div_dgl_gcn_forward(
        params, adj_norm, feature_ids, user_index, item_index, hop,
        tm=128, tk=128, compute_dtype=jnp.float32)
    jax.block_until_ready((si_f32, sf_f32))
    assert si_f32.shape == (B, K) and sf_f32.shape == (B, K, n_feature)
    np.testing.assert_allclose(np.asarray(si_f32), np.asarray(si_ref),
                               rtol=1e-4, atol=1e-5)
    np.testing.assert_allclose(np.asarray(sf_f32), np.asarray(sf_ref),
                               rtol=1e-4, atol=1e-5)

    # 2) production defaults: bf16 streams, f32 accumulate, large tiles.
    si_bf, sf_bf = div_dgl_gcn_forward(
        params, adj_norm, feature_ids, user_index, item_index, hop)
    jax.block_until_ready((si_bf, sf_bf))
    assert si_bf.shape == (B, K) and sf_bf.shape == (B, K, n_feature)
    np.testing.assert_allclose(np.asarray(si_bf), np.asarray(si_ref),
                               rtol=5e-2, atol=5e-2)
    np.testing.assert_allclose(np.asarray(sf_bf), np.asarray(sf_ref),
                               rtol=5e-2, atol=5e-2)

    print("KERNEL_OK")
</pallas_src>

<mosaic_0001>
module attributes {stable_mosaic.version = 11 : i64} {
  func.func @_gcn_hop_kernel(%arg0: i32, %arg1: i32, %arg2: memref<128x128xf32, #tpu.memory_space<vmem>>, %arg3: memref<128x128xf32, #tpu.memory_space<vmem>>, %arg4: memref<128x128xf32, #tpu.memory_space<vmem>>, %arg5: memref<1x128xf32, #tpu.memory_space<vmem>>, %arg6: memref<128x128xf32, #tpu.memory_space<vmem>>, %arg7: memref<128x128xf32, #tpu.memory_space<vmem>>) attributes {dimension_semantics = [#tpu.dimension_semantics<parallel>, #tpu.dimension_semantics<arbitrary>], iteration_bounds = array<i64: 3, 3>, scalar_prefetch = 0 : i64, scratch_operands = 1 : i64, tpu.core_type = #tpu.core_type<tc>, window_params = [{transform_indices = @transform_0, window_bounds = array<i64: 128, 128>}, {transform_indices = @transform_1, window_bounds = array<i64: 128, 128>}, {pipeline_mode = #tpu.pipeline_mode<synchronous>, transform_indices = @transform_2, window_bounds = array<i64: 128, 128>}, {pipeline_mode = #tpu.pipeline_mode<synchronous>, transform_indices = @transform_3, window_bounds = array<i64: 1, 128>}, {transform_indices = @transform_4, window_bounds = array<i64: 128, 128>}]} {
    %c0_i32 = arith.constant 0 : i32
    %0 = arith.cmpi eq, %arg1, %c0_i32 : i32
    %1 = arith.extui %0 : i1 to i32
    %c0_i32_0 = arith.constant 0 : i32
    %2 = arith.cmpi ne, %1, %c0_i32_0 : i32
    scf.if %2 {
      %cst_9 = arith.constant 0.000000e+00 : f32
      %12 = vector.broadcast %cst_9 : f32 to vector<128x128xf32>
      %c0_10 = arith.constant 0 : index
      %c0_11 = arith.constant 0 : index
      %13 = vector.load %arg7[%c0_10, %c0_11] : memref<128x128xf32, #tpu.memory_space<vmem>>, vector<128x128xf32>
      tpu.vector_store %arg7[%c0_10, %c0_11], %12 {strides = array<i32>} : memref<128x128xf32, #tpu.memory_space<vmem>>, vector<128x128xf32>,
    } else {
    }
    %c0 = arith.constant 0 : index
    %c0_1 = arith.constant 0 : index
    %3 = vector.load %arg7[%c0, %c0_1] : memref<128x128xf32, #tpu.memory_space<vmem>>, vector<128x128xf32>
    %c0_2 = arith.constant 0 : index
    %c0_3 = arith.constant 0 : index
    %4 = vector.load %arg2[%c0_2, %c0_3] : memref<128x128xf32, #tpu.memory_space<vmem>>, vector<128x128xf32>
    %c0_4 = arith.constant 0 : index
    %c0_5 = arith.constant 0 : index
    %5 = vector.load %arg3[%c0_4, %c0_5] : memref<128x128xf32, #tpu.memory_space<vmem>>, vector<128x128xf32>
    %cst = arith.constant dense<0.000000e+00> : vector<128x128xf32>
    %6 = tpu.matmul %4, %5, %cst {dimension_numbers = #tpu.dot_dimension_numbers<[1], [0], [0], [1], [0, 0, 1, 1], [], []>} : vector<128x128xf32>, vector<128x128xf32>, vector<128x128xf32> -> vector<128x128xf32>
    %7 = arith.addf %3, %6 : vector<128x128xf32>
    %c0_6 = arith.constant 0 : index
    %c0_7 = arith.constant 0 : index
    %8 = vector.load %arg7[%c0_6, %c0_7] : memref<128x128xf32, #tpu.memory_space<vmem>>, vector<128x128xf32>
    tpu.vector_store %arg7[%c0_6, %c0_7], %7 {strides = array<i32>} : memref<128x128xf32, #tpu.memory_space<vmem>>, vector<128x128xf32>,
    %c2_i32 = arith.constant 2 : i32
    %9 = arith.cmpi eq, %arg1, %c2_i32 : i32
    %10 = arith.extui %9 : i1 to i32
    %c0_i32_8 = arith.constant 0 : i32
    %11 = arith.cmpi ne, %10, %c0_i32_8 : i32
    scf.if %11 {
      %c0_9 = arith.constant 0 : index
      %c0_10 = arith.constant 0 : index
      %12 = vector.load %arg7[%c0_9, %c0_10] : memref<128x128xf32, #tpu.memory_space<vmem>>, vector<128x128xf32>
      %c0_11 = arith.constant 0 : index
      %c0_12 = arith.constant 0 : index
      %13 = vector.load %arg4[%c0_11, %c0_12] : memref<128x128xf32, #tpu.memory_space<vmem>>, vector<128x128xf32>
      %cst_13 = arith.constant dense<0.000000e+00> : vector<128x128xf32>
      %14 = tpu.matmul %12, %13, %cst_13 {dimension_numbers = #tpu.dot_dimension_numbers<[1], [0], [0], [1], [0, 0, 1, 1], [], []>} : vector<128x128xf32>, vector<128x128xf32>, vector<128x128xf32> -> vector<128x128xf32>
      %c0_14 = arith.constant 0 : index
      %c0_15 = arith.constant 0 : index
      %15 = vector.load %arg5[%c0_14, %c0_15] : memref<1x128xf32, #tpu.memory_space<vmem>>, vector<1x128xf32>
      %16 = vector.broadcast %15 : vector<1x128xf32> to vector<128x128xf32>
      %17 = arith.addf %14, %16 : vector<128x128xf32>
      %18 = math.tanh %17 : vector<128x128xf32>
      %c0_16 = arith.constant 0 : index
      %c0_17 = arith.constant 0 : index
      %19 = vector.load %arg6[%c0_16, %c0_17] : memref<128x128xf32, #tpu.memory_space<vmem>>, vector<128x128xf32>
      tpu.vector_store %arg6[%c0_16, %c0_17], %18 {strides = array<i32>} : memref<128x128xf32, #tpu.memory_space<vmem>>, vector<128x128xf32>,
    } else {
    }
    return
  }
  func.func @transform_0(%arg0: i32, %arg1: i32) -> (i32, i32) {
    %c0_i32 = arith.constant 0 : i32
    return %arg0, %arg1 : i32, i32
  }
  func.func @transform_1(%arg0: i32, %arg1: i32) -> (i32, i32) {
    %c0_i32 = arith.constant 0 : i32
    %c0_i32_0 = arith.constant 0 : i32
    return %arg1, %c0_i32 : i32, i32
  }
  func.func @transform_2(%arg0: i32, %arg1: i32) -> (i32, i32) {
    %c0_i32 = arith.constant 0 : i32
    %c0_i32_0 = arith.constant 0 : i32
    %c0_i32_1 = arith.constant 0 : i32
    return %c0_i32, %c0_i32_0 : i32, i32
  }
  func.func @transform_3(%arg0: i32, %arg1: i32) -> (i32, i32) {
    %c0_i32 = arith.constant 0 : i32
    %c0_i32_0 = arith.constant 0 : i32
    %c0_i32_1 = arith.constant 0 : i32
    return %c0_i32, %c0_i32_0 : i32, i32
  }
  func.func @transform_4(%arg0: i32, %arg1: i32) -> (i32, i32) {
    %c0_i32 = arith.constant 0 : i32
    %c0_i32_0 = arith.constant 0 : i32
    return %arg0, %c0_i32 : i32, i32
  }
}

</mosaic_0001>

<llo_original>
// kernel: tpu_custom_call.1
$region0: #{tpu_custom_call.1}
  #allocation0 [shape = 'u32[]', space=smem, size = 0x4, offset = 0x4, fixed_abs, tag = 'smem constant byte address 0x4 - core index']
  #allocation1 [shape = 'u32[144,128]{1,0:T(1,128)}', space=vmem, size = 0x12000, scoped, tag = 'internal scratch']
  #allocation2 [shape = 'f32[128,128]{1,0:T(8,128)}', space=vmem, size = 0x10000, scoped, tag = 'scratch operand']
  %s0 = inlined_call_operand.hbm [shape: f32[384,384], index: 0, kind: input, shape index: {}]
  %s1 = inlined_call_operand.hbm [shape: f32[384,128], index: 1, kind: input, shape index: {}]
  %s2 = inlined_call_operand.hbm [shape: f32[128,128], index: 2, kind: input, shape index: {}]
  %s3 = inlined_call_operand.vmem [shape: f32[1,128], index: 3, kind: input, shape index: {}]
  %s4 = inlined_call_operand.hbm [shape: f32[384,128], index: 4, kind: output, shape index: {}]
  %s5 = sld [smem:[#allocation0]]
  $region69: #{tpu_custom_call.1} parent=0
    _
  %s7 = ssub.s32 1, %s5
  %s8 = scalar_select 0, %s7, %s5
  $region1: #{tpu_custom_call.1} parent=0
    #allocation3 [shape = 'u8[131072]{0}', space=vmem, size = 0x20000, scoped, tag = 'input window, operand 0']
    #allocation4 [shape = 's32[2]{0}', space=sflag, size = 0x8, scoped, tag = 'scoped memory for tpu_custom_call.1']
    #allocation5 [shape = 's32[2]{0}', space=sflag, size = 0x8, scoped, tag = 'scoped memory for tpu_custom_call.1']
    #allocation6 [shape = 'u8[131072]{0}', space=vmem, size = 0x20000, scoped, tag = 'input window, operand 1']
    #allocation7 [shape = 's32[2]{0}', space=sflag, size = 0x8, scoped, tag = 'scoped memory for tpu_custom_call.1']
    #allocation8 [shape = 'u8[65536]{0}', space=vmem, size = 0x10000, scoped, tag = 'input window, operand 2, single buffered']
    #allocation9 [shape = 'u8[131072]{0}', space=vmem, size = 0x20000, scoped, tag = 'output window, operand 0']
    %9 = vsyncpa [#allocation4], 0
    %s10 = scalar_lea.sflag [#allocation4], 1
    %11 = vsyncpa %s10, 0
    %12 = vsyncpa [#allocation7], 0
    %s13 = scalar_lea.sflag [#allocation7], 1
    %14 = vsyncpa %s13, 0
    %15 = vsyncpa [#allocation5], 0
    %s16 = scalar_lea.sflag [#allocation5], 1
    %17 = vsyncpa %s16, 0
    loop: start=0, step=1, limit=11
    $region2: #{tpu_custom_call.1} parent=1 // loop_pre_header
      _
    $region3: #{tpu_custom_call.1} parent=1 // loop_header
      %s19 = sphi 0, %s23
      %p20 = scmp.ge.s32.totalorder %s19, 11
      %s26 = sphi 0, %s38
      %s27 = sphi 0, %s34
      %s28 = sphi 0, %s26
      %s29 = sphi 0, %s27
      %s30 = sphi 0, %s28
      %s31 = sphi 0, %s29
      %s43 = sphi 0, %s45
      %s46 = sphi 0, %s43
      %s47 = sphi 0, %s46
      %s63 = sphi 0, %s47
      %s69 = sphi 0, %s71
      %s72 = sphi 0, %s69
      %s73 = sphi 0, %s72
      %s89 = sphi 0, %s73
      %s93 = sphi 0, %s93
      %s95 = sphi 0, %s93
      %s96 = sphi 0, %s95
      %s110 = sphi 0, %s96
      %s114 = sphi 0, %s114
      %s116 = sphi 0, %s114
      %s117 = sphi 0, %s116
      %s131 = sphi 0, %s117
      %s137 = sphi 0, %s139
      %s140 = sphi 0, %s137
      %s141 = sphi 0, %s140
      %s157 = sphi 0, %s141
    $region4: #{tpu_custom_call.1} parent=1 // loop_header_branch
      %22 = sbr.rel (%p20) target = $region8
    $region5: #{tpu_custom_call.1} parent=1 // loop_body
      %s24 = ssub.s32 %s19, 1
      %s25 = ssub.s32 %s19, 2
      %s32 = sadd.s32 1, %s27
      %p33 = scmp.ge.s32.totalorder %s32, 3
      %s34 = scalar_select %p33, 0, %s32
      %s35 = sadd.s32 1, %s26
      %s36 = scalar_select %p33, %s35, %s26
      %p37 = scmp.ge.s32.totalorder %s36, 3
      %s38 = scalar_select %p37, 0, %s36
      %s39 = ssub.s32 %s26, %s38
      %s40 = ssub.s32 %s27, %s34
      %s41 = sor.u32 %s39, %s40
      %p42 = scmp.eq.s32.totalorder %s41, 0
      %s44 = sadd.s32 %s43, 1
      %s45 = scalar_select %p42, %s43, %s44
      %p48 = pneg %p42
      %p49 = scmp.eq.s32.totalorder %s19, 8
      %p50 = por %p48, %p49
      %p51 = scmp.ne.s32.totalorder %s43, %s46
      %p52 = scmp.eq.s32.totalorder %s19, 0
      %p53 = por %p51, %p52
      %p54 = scmp.ne.s32.totalorder %s43, %s46
      %p55 = scmp.eq.s32.totalorder %s24, 8
      %p56 = por %p54, %p55
      %p57 = scmp.ne.s32.totalorder %s46, %s47
      %p58 = scmp.eq.s32.totalorder %s24, 0
      %p59 = por %p57, %p58
      %p60 = scmp.ne.s32.totalorder %s46, %s47
      %p61 = scmp.eq.s32.totalorder %s25, 8
      %p62 = por %p60, %p61
      %p64 = scmp.ne.s32.totalorder %s47, %s63
      %p65 = scmp.eq.s32.totalorder %s25, 0
      %p66 = por %p64, %p65
      %s67 = ssub.s32 %s27, %s34
      %p68 = scmp.eq.s32.totalorder %s67, 0
      %s70 = sadd.s32 %s69, 1
      %s71 = scalar_select %p68, %s69, %s70
      %p74 = pneg %p68
      %p75 = scmp.eq.s32.totalorder %s19, 8
      %p76 = por %p74, %p75
      %p77 = scmp.ne.s32.totalorder %s69, %s72
      %p78 = scmp.eq.s32.totalorder %s19, 0
      %p79 = por %p77, %p78
      %p80 = scmp.ne.s32.totalorder %s69, %s72
      %p81 = scmp.eq.s32.totalorder %s24, 8
      %p82 = por %p80, %p81
      %p83 = scmp.ne.s32.totalorder %s72, %s73
      %p84 = scmp.eq.s32.totalorder %s24, 0
      %p85 = por %p83, %p84
      %p86 = scmp.ne.s32.totalorder %s72, %s73
      %p87 = scmp.eq.s32.totalorder %s25, 8
      %p88 = por %p86, %p87
      %p90 = scmp.ne.s32.totalorder %s73, %s89
      %p91 = scmp.eq.s32.totalorder %s25, 0
      %p92 = por %p90, %p91
      %s94 = sadd.s32 %s93, 1
      %p97 = scmp.eq.s32.totalorder %s19, 8
      %p98 = scmp.ne.s32.totalorder %s93, %s95
      %p99 = scmp.eq.s32.totalorder %s19, 0
      %p100 = por %p98, %p99
      %p101 = scmp.ne.s32.totalorder %s93, %s95
      %p102 = scmp.eq.s32.totalorder %s24, 8
      %p103 = por %p101, %p102
      %p104 = scmp.ne.s32.totalorder %s95, %s96
      %p105 = scmp.eq.s32.totalorder %s24, 0
      %p106 = por %p104, %p105
      %p107 = scmp.ne.s32.totalorder %s95, %s96
      %p108 = scmp.eq.s32.totalorder %s25, 8
      %p109 = por %p107, %p108
      %p111 = scmp.ne.s32.totalorder %s96, %s110
      %p112 = scmp.eq.s32.totalorder %s25, 0
      %p113 = por %p111, %p112
      %s115 = sadd.s32 %s114, 1
      %p118 = scmp.eq.s32.totalorder %s19, 8
      %p119 = scmp.ne.s32.totalorder %s114, %s116
      %p120 = scmp.eq.s32.totalorder %s19, 0
      %p121 = por %p119, %p120
      %p122 = scmp.ne.s32.totalorder %s114, %s116
      %p123 = scmp.eq.s32.totalorder %s24, 8
      %p124 = por %p122, %p123
      %p125 = scmp.ne.s32.totalorder %s116, %s117
      %p126 = scmp.eq.s32.totalorder %s24, 0
      %p127 = por %p125, %p126
      %p128 = scmp.ne.s32.totalorder %s116, %s117
      %p129 = scmp.eq.s32.totalorder %s25, 8
      %p130 = por %p128, %p129
      %p132 = scmp.ne.s32.totalorder %s117, %s131
      %p133 = scmp.eq.s32.totalorder %s25, 0
      %p134 = por %p132, %p133
      %s135 = ssub.s32 %s26, %s38
      %p136 = scmp.eq.s32.totalorder %s135, 0
      %s138 = sadd.s32 %s137, 1
      %s139 = scalar_select %p136, %s137, %s138
      %p142 = pneg %p136
      %p143 = scmp.eq.s32.totalorder %s19, 8
      %p144 = por %p142, %p143
      %p145 = scmp.ne.s32.totalorder %s137, %s140
      %p146 = scmp.eq.s32.totalorder %s19, 0
      %p147 = por %p145, %p146
      %p148 = scmp.ne.s32.totalorder %s137, %s140
      %p149 = scmp.eq.s32.totalorder %s24, 8
      %p150 = por %p148, %p149
      %p151 = scmp.ne.s32.totalorder %s140, %s141
      %p152 = scmp.eq.s32.totalorder %s24, 0
      %p153 = por %p151, %p152
      %p154 = scmp.ne.s32.totalorder %s140, %s141
      %p155 = scmp.eq.s32.totalorder %s25, 8
      %p156 = por %p154, %p155
      %p158 = scmp.ne.s32.totalorder %s141, %s157
      %p159 = scmp.eq.s32.totalorder %s25, 0
      %p160 = por %p158, %p159
      %p161 = scmp.le.s32.totalorder 1, %s19
      %p162 = scmp.lt.s32.totalorder %s19, 10
      %p163 = pnand %p161, %p162
      %p164 = pneg %p163
      // Predicated region
      $region9: #{tpu_custom_call.1} parent=5 // pred_check
        _
      $region10: #{tpu_custom_call.1} parent=5 // pred_check_branch
        %166 = sbr.rel (%p163) target = $region12
      $region11: #{tpu_custom_call.1} parent=5 // pred_region
        %s167 = ssub.s32 %s19, 1
        // Predicated region
        $region13: #{tpu_custom_call.1} parent=11 // pred_check
          %p168 = pneg %p106
        $region14: #{tpu_custom_call.1} parent=11 // pred_check_branch
          %170 = sbr.rel (%p168) target = $region16
        $region15: #{tpu_custom_call.1} parent=11 // pred_region
          %s172 = ssub.s32 2048, 2048
          %173 = vsyncadd [#allocation7], %s172
          %s174 = sshll.u32 [#allocation8], 4
          %s175 = int_to_ptr.vmem [resolvable:$true] %s174
          %180 = dma.hbm_to_vmem [thread:$0]  %s2, 2048, %s175, [#allocation7], 128, 128, 8
        $region16: #{tpu_custom_call.1} parent=11 // pred_fallthru
          _
        // Predicated region
        $region17: #{tpu_custom_call.1} parent=11 // pred_check
          %p181 = pneg %p127
        $region18: #{tpu_custom_call.1} parent=11 // pred_check_branch
          %183 = sbr.rel (%p181) target = $region20
        $region19: #{tpu_custom_call.1} parent=11 // pred_region
          _
        $region20: #{tpu_custom_call.1} parent=11 // pred_fallthru
          _
      $region12: #{tpu_custom_call.1} parent=5 // pred_fallthru
        _
      %p184 = scmp.lt.s32.totalorder %s19, 9
      // Predicated region
      $region21: #{tpu_custom_call.1} parent=5 // pred_check
        %p185 = pneg %p184
      $region22: #{tpu_custom_call.1} parent=5 // pred_check_branch
        %187 = sbr.rel (%p185) target = $region24
      $region23: #{tpu_custom_call.1} parent=5 // pred_region
        // Predicated region
        $region25: #{tpu_custom_call.1} parent=23 // pred_check
          %p188 = pneg %p53
        $region26: #{tpu_custom_call.1} parent=23 // pred_check_branch
          %190 = sbr.rel (%p188) target = $region28
        $region27: #{tpu_custom_call.1} parent=23 // pred_region
          %s191 = sand.u32 %s43, 1
          %s192 = scalar_lea.sflag [#allocation4], %s191
          %s193 = sand.u32 %s43, 1
          %s194 = smul.addr %s193, 128
          %s195 = scalar_lea.vmem [#allocation3], %s194
          %s196 = smul.u32 16, %s26
          %s198 = ssub.s32 2048, 2048
          %199 = vsyncadd %s192, %s198
          %s200 = smul.addr %s196, 3
          %s201 = sadd.s32 %s27, %s200
          %s202 = smul.addr %s201, 128
          %s203 = scalar_lea.hbm %s0, %s202
          %s204 = sshll.u32 %s195, 4
          %s205 = int_to_ptr.vmem [resolvable:$true] %s204
          %210 = dma.hbm_to_vmem [thread:$0]  %s203, 2048, %s205, %s192, 384, 128, 8
        $region28: #{tpu_custom_call.1} parent=23 // pred_fallthru
          _
        // Predicated region
        $region29: #{tpu_custom_call.1} parent=23 // pred_check
          %p211 = pneg %p79
        $region30: #{tpu_custom_call.1} parent=23 // pred_check_branch
          %213 = sbr.rel (%p211) target = $region32
        $region31: #{tpu_custom_call.1} parent=23 // pred_region
          %s214 = sand.u32 %s19, 1
          %s215 = scalar_lea.sflag [#allocation7], %s214
          %s216 = sand.u32 %s69, 1
          %s217 = smul.addr %s216, 128
          %s218 = scalar_lea.vmem [#allocation6], %s217
          %s219 = smul.u32 16, %s27
          %s221 = ssub.s32 2048, 2048
          %222 = vsyncadd %s215, %s221
          %s223 = smul.addr %s219, 128
          %s224 = scalar_lea.hbm %s1, %s223
          %s225 = sshll.u32 %s218, 4
          %s226 = int_to_ptr.vmem [resolvable:$true] %s225
          %231 = dma.hbm_to_vmem [thread:$0]  %s224, 2048, %s226, %s215, 128, 128, 8
        $region32: #{tpu_custom_call.1} parent=23 // pred_fallthru
          _
      $region24: #{tpu_custom_call.1} parent=5 // pred_fallthru
        _
      %p232 = scmp.le.s32.totalorder 1, %s19
      %p233 = scmp.lt.s32.totalorder %s19, 10
      %p234 = pnand %p232, %p233
      %p235 = pneg %p234
      // Predicated region
      $region33: #{tpu_custom_call.1} parent=5 // pred_check
        _
      $region34: #{tpu_custom_call.1} parent=5 // pred_check_branch
        %237 = sbr.rel (%p234) target = $region36
      $region35: #{tpu_custom_call.1} parent=5 // pred_region
        %s238 = ssub.s32 %s19, 1
        %s239 = sand.u32 %s46, 1
        %s240 = scalar_lea.sflag [#allocation4], %s239
        %s241 = sand.u32 %s46, 1
        %s242 = smul.addr %s241, 128
        %s243 = scalar_lea.vmem [#allocation3], %s242
        // Predicated region
        $region37: #{tpu_custom_call.1} parent=35 // pred_check
          %p244 = pneg %p59
        $region38: #{tpu_custom_call.1} parent=35 // pred_check_branch
          %246 = sbr.rel (%p244) target = $region40
        $region39: #{tpu_custom_call.1} parent=35 // pred_region
          %247 = dma.done %s240, 2048
        $region40: #{tpu_custom_call.1} parent=35 // pred_fallthru
          _
        %s248 = sand.u32 %s24, 1
        %s249 = scalar_lea.sflag [#allocation7], %s248
        %s250 = sand.u32 %s72, 1
        %s251 = smul.addr %s250, 128
        %s252 = scalar_lea.vmem [#allocation6], %s251
        // Predicated region
        $region41: #{tpu_custom_call.1} parent=35 // pred_check
          %p253 = pneg %p85
        $region42: #{tpu_custom_call.1} parent=35 // pred_check_branch
          %255 = sbr.rel (%p253) target = $region44
        $region43: #{tpu_custom_call.1} parent=35 // pred_region
          %256 = dma.done %s249, 2048
        $region44: #{tpu_custom_call.1} parent=35 // pred_fallthru
          _
        // Predicated region
        $region45: #{tpu_custom_call.1} parent=35 // pred_check
          %p257 = pneg %p106
        $region46: #{tpu_custom_call.1} parent=35 // pred_check_branch
          %259 = sbr.rel (%p257) target = $region48
        $region47: #{tpu_custom_call.1} parent=35 // pred_region
          %260 = dma.done [#allocation7], 2048
        $region48: #{tpu_custom_call.1} parent=35 // pred_fallthru
          _
        %s261 = sand.u32 %s46, 1
        %s262 = scalar_lea.sflag [#allocation4], %s261
        %s263 = sand.u32 %s46, 1
        %s264 = smul.addr %s263, 128
        %s265 = scalar_lea.vmem [#allocation3], %s264
        %p266 = pneg %p59
        %p267 = pneg %p56
        %s268 = sand.u32 %s24, 1
        %s269 = scalar_lea.sflag [#allocation7], %s268
        %s270 = sand.u32 %s72, 1
        %s271 = smul.addr %s270, 128
        %s272 = scalar_lea.vmem [#allocation6], %s271
        %p273 = pneg %p85
        %p274 = pneg %p82
        %p275 = pneg %p106
        %p276 = pneg %p103
        %p277 = pneg %p127
        %p278 = pneg %p124
        %p279 = pneg %p153
        %p280 = pneg %p150
        %s281 = sand.u32 %s140, 1
        %s282 = scalar_lea.sflag [#allocation5], %s281
        %s283 = sand.u32 %s140, 1
        %s284 = smul.addr %s283, 128
        %s285 = scalar_lea.vmem [#allocation9], %s284
        %s286 = smul.u32 16, %s28
        %s287 = smul.u32 16, %s29
        %s288 = smul.u32 16, %s28
        %p289 = scmp.eq.s32.totalorder %s29, 0
        // Predicated region
        $region49: #{tpu_custom_call.1} parent=35 // pred_check
          %p290 = pneg %p289
        $region50: #{tpu_custom_call.1} parent=35 // pred_check_branch
          %292 = sbr.rel (%p290) target = $region52
        $region51: #{tpu_custom_call.1} parent=35 // pred_region
          %293 = vst [vmem:[#allocation2] sm:$0xff] 0.0
          %294 = vst [vmem:[#allocation2 + $0x8] sm:$0xff] 0.0
          %295 = vst [vmem:[#allocation2 + $0x10] sm:$0xff] 0.0
          %296 = vst [vmem:[#allocation2 + $0x18] sm:$0xff] 0.0
          %297 = vst [vmem:[#allocation2 + $0x20] sm:$0xff] 0.0
          %298 = vst [vmem:[#allocation2 + $0x28] sm:$0xff] 0.0
          %299 = vst [vmem:[#allocation2 + $0x30] sm:$0xff] 0.0
          %300 = vst [vmem:[#allocation2 + $0x38] sm:$0xff] 0.0
          %301 = vst [vmem:[#allocation2 + $0x40] sm:$0xff] 0.0
          %302 = vst [vmem:[#allocation2 + $0x48] sm:$0xff] 0.0
          %303 = vst [vmem:[#allocation2 + $0x50] sm:$0xff] 0.0
          %304 = vst [vmem:[#allocation2 + $0x58] sm:$0xff] 0.0
          %305 = vst [vmem:[#allocation2 + $0x60] sm:$0xff] 0.0
          %306 = vst [vmem:[#allocation2 + $0x68] sm:$0xff] 0.0
          %307 = vst [vmem:[#allocation2 + $0x70] sm:$0xff] 0.0
          %308 = vst [vmem:[#allocation2 + $0x78] sm:$0xff] 0.0
        $region52: #{tpu_custom_call.1} parent=35 // pred_fallthru
          _
        %v309 = vld [vmem:[#allocation2] sm:$0xff]
        %v310 = vld [vmem:[#allocation2 + $0x8] sm:$0xff]
        %v311 = vld [vmem:[#allocation2 + $0x10] sm:$0xff]
        %v312 = vld [vmem:[#allocation2 + $0x18] sm:$0xff]
        %v313 = vld [vmem:[#allocation2 + $0x20] sm:$0xff]
        %v314 = vld [vmem:[#allocation2 + $0x28] sm:$0xff]
        %v315 = vld [vmem:[#allocation2 + $0x30] sm:$0xff]
        %v316 = vld [vmem:[#allocation2 + $0x38] sm:$0xff]
        %v317 = vld [vmem:[#allocation2 + $0x40] sm:$0xff]
        %v318 = vld [vmem:[#allocation2 + $0x48] sm:$0xff]
        %v319 = vld [vmem:[#allocation2 + $0x50] sm:$0xff]
        %v320 = vld [vmem:[#allocation2 + $0x58] sm:$0xff]
        %v321 = vld [vmem:[#allocation2 + $0x60] sm:$0xff]
        %v322 = vld [vmem:[#allocation2 + $0x68] sm:$0xff]
        %v323 = vld [vmem:[#allocation2 + $0x70] sm:$0xff]
        %v324 = vld [vmem:[#allocation2 + $0x78] sm:$0xff]
        %v325 = vld [vmem:[%s243] sm:$0xff]
        %v326 = vld [vmem:[%s243 + $0x8] sm:$0xff]
        %v327 = vld [vmem:[%s243 + $0x10] sm:$0xff]
        %v328 = vld [vmem:[%s243 + $0x18] sm:$0xff]
        %v329 = vld [vmem:[%s243 + $0x20] sm:$0xff]
        %v330 = vld [vmem:[%s243 + $0x28] sm:$0xff]
        %v331 = vld [vmem:[%s243 + $0x30] sm:$0xff]
        %v332 = vld [vmem:[%s243 + $0x38] sm:$0xff]
        %v333 = vld [vmem:[%s243 + $0x40] sm:$0xff]
        %v334 = vld [vmem:[%s243 + $0x48] sm:$0xff]
        %v335 = vld [vmem:[%s243 + $0x50] sm:$0xff]
        %v336 = vld [vmem:[%s243 + $0x58] sm:$0xff]
        %v337 = vld [vmem:[%s243 + $0x60] sm:$0xff]
        %v338 = vld [vmem:[%s243 + $0x68] sm:$0xff]
        %v339 = vld [vmem:[%s243 + $0x70] sm:$0xff]
        %v340 = vld [vmem:[%s243 + $0x78] sm:$0xff]
        %v341 = vld [vmem:[%s252] sm:$0xff]
        %v342 = vld [vmem:[%s252 + $0x8] sm:$0xff]
        %v343 = vld [vmem:[%s252 + $0x10] sm:$0xff]
        %v344 = vld [vmem:[%s252 + $0x18] sm:$0xff]
        %v345 = vld [vmem:[%s252 + $0x20] sm:$0xff]
        %v346 = vld [vmem:[%s252 + $0x28] sm:$0xff]
        %v347 = vld [vmem:[%s252 + $0x30] sm:$0xff]
        %v348 = vld [vmem:[%s252 + $0x38] sm:$0xff]
        %v349 = vld [vmem:[%s252 + $0x40] sm:$0xff]
        %v350 = vld [vmem:[%s252 + $0x48] sm:$0xff]
        %v351 = vld [vmem:[%s252 + $0x50] sm:$0xff]
        %v352 = vld [vmem:[%s252 + $0x58] sm:$0xff]
        %v353 = vld [vmem:[%s252 + $0x60] sm:$0xff]
        %v354 = vld [vmem:[%s252 + $0x68] sm:$0xff]
        %v355 = vld [vmem:[%s252 + $0x70] sm:$0xff]
        %v356 = vld [vmem:[%s252 + $0x78] sm:$0xff]
        %357 = vmatprep.subr.mxu0 0.0
        %358 = vmatpush1.msra.mxu0 %v341
        %359 = vmatprep.subr.mxu0 0.0
        %360 = vmatpush1.msra.mxu0 %v342
        %361 = vmatprep.subr.mxu0 0.0
        %362 = vmatpush1.msra.mxu0 %v343
        %363 = vmatprep.subr.mxu0 0.0
        %364 = vmatpush1.msra.mxu0 %v344
        %365 = vmatprep.subr.mxu0 0.0
        %366 = vmatpush1.msra.mxu0 %v345
        %367 = vmatprep.subr.mxu0 0.0
        %368 = vmatpush1.msra.mxu0 %v346
        %369 = vmatprep.subr.mxu0 0.0
        %370 = vmatpush1.msra.mxu0 %v347
        %371 = vmatprep.subr.mxu0 0.0
        %372 = vmatpush1.msra.mxu0 %v348
        %373 = vmatprep.subr.mxu0 0.0
        %374 = vmatpush1.msra.mxu0 %v349
        %375 = vmatprep.subr.mxu0 0.0
        %376 = vmatpush1.msra.mxu0 %v350
        %377 = vmatprep.subr.mxu0 0.0
        %378 = vmatpush1.msra.mxu0 %v351
        %379 = vmatprep.subr.mxu0 0.0
        %380 = vmatpush1.msra.mxu0 %v352
        %381 = vmatprep.subr.mxu0 0.0
        %382 = vmatpush1.msra.mxu0 %v353
        %383 = vmatprep.subr.mxu0 0.0
        %384 = vmatpush1.msra.mxu0 %v354
        %385 = vmatprep.subr.mxu0 0.0
        %386 = vmatpush1.msra.mxu0 %v355
        %387 = vmatprep.subr.mxu0 0.0
        %388 = vmatpush1.msra.mxu0 %v356
        %389 = vmatprep.subr.mxu0 0.0
        %390 = vmatpush1.msra.mxu0 0.0
        %391 = vmatprep.subr.mxu0 0.0
        %392 = vmatpush1.msra.mxu0 0.0
        %393 = vmatprep.subr.mxu0 0.0
        %394 = vmatpush1.msra.mxu0 0.0
        %395 = vmatprep.subr.mxu0 0.0
        %396 = vmatpush1.msra.mxu0 0.0
        %397 = vmatprep.subr.mxu0 0.0
        %398 = vmatpush1.msra.mxu0 0.0
        %399 = vmatprep.subr.mxu0 0.0
        %400 = vmatpush1.msra.mxu0 0.0
        %401 = vmatprep.subr.mxu0 0.0
        %402 = vmatpush1.msra.mxu0 0.0
        %403 = vmatprep.subr.mxu0 0.0
        %404 = vmatpush1.msra.mxu0 0.0
        %405 = vmatprep.subr.mxu0 0.0
        %406 = vmatpush1.msra.mxu0 0.0
        %407 = vmatprep.subr.mxu0 0.0
        %408 = vmatpush1.msra.mxu0 0.0
        %409 = vmatprep.subr.mxu0 0.0
        %410 = vmatpush1.msra.mxu0 0.0
        %411 = vmatprep.subr.mxu0 0.0
        %412 = vmatpush1.msra.mxu0 0.0
        %413 = vmatprep.subr.mxu0 0.0
        %414 = vmatpush1.msra.mxu0 0.0
        %415 = vmatprep.subr.mxu0 0.0
        %416 = vmatpush1.msra.mxu0 0.0
        %417 = vmatprep.subr.mxu0 0.0
        %418 = vmatpush1.msra.mxu0 0.0
        %419 = vmatprep.subr.mxu0 0.0
        %420 = vmatpush1.msra.mxu0 0.0
        %421 = vmatprep.mubr.f32.mxu0 0.0
        %422 = vmatmul.mubr.f32.gmra.mrb[0].mxu0 %v325
        %v423 = vpop.f32.mrb[0].mxu0
        %v424 = vadd.f32 0.0, %v423
        %v425 = vpop.f32.mrb[0].mxu0
        %426 = vmatprep.mubr.f32.mxu0 0.0
        %427 = vmatmul.mubr.f32.gmra.mrb[0].mxu0 %v326
        %v428 = vpop.f32.mrb[0].mxu0
        %v429 = vadd.f32 0.0, %v428
        %v430 = vpop.f32.mrb[0].mxu0
        %431 = vmatprep.mubr.f32.mxu0 0.0
        %432 = vmatmul.mubr.f32.gmra.mrb[0].mxu0 %v327
        %v433 = vpop.f32.mrb[0].mxu0
        %v434 = vadd.f32 0.0, %v433
        %v435 = vpop.f32.mrb[0].mxu0
        %436 = vmatprep.mubr.f32.mxu0 0.0
        %437 = vmatmul.mubr.f32.gmra.mrb[0].mxu0 %v328
        %v438 = vpop.f32.mrb[0].mxu0
        %v439 = vadd.f32 0.0, %v438
        %v440 = vpop.f32.mrb[0].mxu0
        %441 = vmatprep.mubr.f32.mxu0 0.0
        %442 = vmatmul.mubr.f32.gmra.mrb[0].mxu0 %v329
        %v443 = vpop.f32.mrb[0].mxu0
        %v444 = vadd.f32 0.0, %v443
        %v445 = vpop.f32.mrb[0].mxu0
        %446 = vmatprep.mubr.f32.mxu0 0.0
        %447 = vmatmul.mubr.f32.gmra.mrb[0].mxu0 %v330
        %v448 = vpop.f32.mrb[0].mxu0
        %v449 = vadd.f32 0.0, %v448
        %v450 = vpop.f32.mrb[0].mxu0
        %451 = vmatprep.mubr.f32.mxu0 0.0
        %452 = vmatmul.mubr.f32.gmra.mrb[0].mxu0 %v331
        %v453 = vpop.f32.mrb[0].mxu0
        %v454 = vadd.f32 0.0, %v453
        %v455 = vpop.f32.mrb[0].mxu0
        %456 = vmatprep.mubr.f32.mxu0 0.0
        %457 = vmatmul.mubr.f32.gmra.mrb[0].mxu0 %v332
        %v458 = vpop.f32.mrb[0].mxu0
        %v459 = vadd.f32 0.0, %v458
        %v460 = vpop.f32.mrb[0].mxu0
        %461 = vmatprep.mubr.f32.mxu0 0.0
        %462 = vmatmul.mubr.f32.gmra.mrb[0].mxu0 %v333
        %v463 = vpop.f32.mrb[0].mxu0
        %v464 = vadd.f32 0.0, %v463
        %v465 = vpop.f32.mrb[0].mxu0
        %466 = vmatprep.mubr.f32.mxu0 0.0
        %467 = vmatmul.mubr.f32.gmra.mrb[0].mxu0 %v334
        %v468 = vpop.f32.mrb[0].mxu0
        %v469 = vadd.f32 0.0, %v468
        %v470 = vpop.f32.mrb[0].mxu0
        %471 = vmatprep.mubr.f32.mxu0 0.0
        %472 = vmatmul.mubr.f32.gmra.mrb[0].mxu0 %v335
        %v473 = vpop.f32.mrb[0].mxu0
        %v474 = vadd.f32 0.0, %v473
        %v475 = vpop.f32.mrb[0].mxu0
        %476 = vmatprep.mubr.f32.mxu0 0.0
        %477 = vmatmul.mubr.f32.gmra.mrb[0].mxu0 %v336
        %v478 = vpop.f32.mrb[0].mxu0
        %v479 = vadd.f32 0.0, %v478
        %v480 = vpop.f32.mrb[0].mxu0
        %481 = vmatprep.mubr.f32.mxu0 0.0
        %482 = vmatmul.mubr.f32.gmra.mrb[0].mxu0 %v337
        %v483 = vpop.f32.mrb[0].mxu0
        %v484 = vadd.f32 0.0, %v483
        %v485 = vpop.f32.mrb[0].mxu0
        %486 = vmatprep.mubr.f32.mxu0 0.0
        %487 = vmatmul.mubr.f32.gmra.mrb[0].mxu0 %v338
        %v488 = vpop.f32.mrb[0].mxu0
        %v489 = vadd.f32 0.0, %v488
        %v490 = vpop.f32.mrb[0].mxu0
        %491 = vmatprep.mubr.f32.mxu0 0.0
        %492 = vmatmul.mubr.f32.gmra.mrb[0].mxu0 %v339
        %v493 = vpop.f32.mrb[0].mxu0
        %v494 = vadd.f32 0.0, %v493
        %v495 = vpop.f32.mrb[0].mxu0
        %496 = vmatprep.mubr.f32.mxu0 0.0
        %497 = vmatmul.mubr.f32.gmra.mrb[0].mxu0 %v340
        %v498 = vpop.f32.mrb[0].mxu0
        %v499 = vadd.f32 0.0, %v498
        %v500 = vpop.f32.mrb[0].mxu0
        %501 = vdwg.mxu0
        %v502 = vadd.f32 %v309, %v424
        %v503 = vadd.f32 %v310, %v429
        %v504 = vadd.f32 %v311, %v434
        %v505 = vadd.f32 %v312, %v439
        %v506 = vadd.f32 %v313, %v444
        %v507 = vadd.f32 %v314, %v449
        %v508 = vadd.f32 %v315, %v454
        %v509 = vadd.f32 %v316, %v459
        %v510 = vadd.f32 %v317, %v464
        %v511 = vadd.f32 %v318, %v469
        %v512 = vadd.f32 %v319, %v474
        %v513 = vadd.f32 %v320, %v479
        %v514 = vadd.f32 %v321, %v484
        %v515 = vadd.f32 %v322, %v489
        %v516 = vadd.f32 %v323, %v494
        %v517 = vadd.f32 %v324, %v499
        %518 = vst [vmem:[#allocation2] sm:$0xff] %v502
        %519 = vst [vmem:[#allocation2 + $0x8] sm:$0xff] %v503
        %520 = vst [vmem:[#allocation2 + $0x10] sm:$0xff] %v504
        %521 = vst [vmem:[#allocation2 + $0x18] sm:$0xff] %v505
        %522 = vst [vmem:[#allocation2 + $0x20] sm:$0xff] %v506
        %523 = vst [vmem:[#allocation2 + $0x28] sm:$0xff] %v507
        %524 = vst [vmem:[#allocation2 + $0x30] sm:$0xff] %v508
        %525 = vst [vmem:[#allocation2 + $0x38] sm:$0xff] %v509
        %526 = vst [vmem:[#allocation2 + $0x40] sm:$0xff] %v510
        %527 = vst [vmem:[#allocation2 + $0x48] sm:$0xff] %v511
        %528 = vst [vmem:[#allocation2 + $0x50] sm:$0xff] %v512
        %529 = vst [vmem:[#allocation2 + $0x58] sm:$0xff] %v513
        %530 = vst [vmem:[#allocation2 + $0x60] sm:$0xff] %v514
        %531 = vst [vmem:[#allocation2 + $0x68] sm:$0xff] %v515
        %532 = vst [vmem:[#allocation2 + $0x70] sm:$0xff] %v516
        %533 = vst [vmem:[#allocation2 + $0x78] sm:$0xff] %v517
        %p534 = scmp.eq.s32.totalorder %s29, 2
        // Predicated region
        $region53: #{tpu_custom_call.1} parent=35 // pred_check
          %p535 = pneg %p534
        $region54: #{tpu_custom_call.1} parent=35 // pred_check_branch
          %537 = sbr.rel (%p535) target = $region56
        $region55: #{tpu_custom_call.1} parent=35 // pred_region
          %v538 = vld [vmem:[#allocation2] sm:$0xff]
          %v539 = vld [vmem:[#allocation2 + $0x8] sm:$0xff]
          %v540 = vld [vmem:[#allocation2 + $0x10] sm:$0xff]
          %v541 = vld [vmem:[#allocation2 + $0x18] sm:$0xff]
          %v542 = vld [vmem:[#allocation2 + $0x20] sm:$0xff]
          %v543 = vld [vmem:[#allocation2 + $0x28] sm:$0xff]
          %v544 = vld [vmem:[#allocation2 + $0x30] sm:$0xff]
          %v545 = vld [vmem:[#allocation2 + $0x38] sm:$0xff]
          %v546 = vld [vmem:[#allocation2 + $0x40] sm:$0xff]
          %v547 = vld [vmem:[#allocation2 + $0x48] sm:$0xff]
          %v548 = vld [vmem:[#allocation2 + $0x50] sm:$0xff]
          %v549 = vld [vmem:[#allocation2 + $0x58] sm:$0xff]
          %v550 = vld [vmem:[#allocation2 + $0x60] sm:$0xff]
          %v551 = vld [vmem:[#allocation2 + $0x68] sm:$0xff]
          %v552 = vld [vmem:[#allocation2 + $0x70] sm:$0xff]
          %v553 = vld [vmem:[#allocation2 + $0x78] sm:$0xff]
          %v554 = vld [vmem:[#allocation8] sm:$0xff]
          %v555 = vld [vmem:[#allocation8 + $0x8] sm:$0xff]
          %v556 = vld [vmem:[#allocation8 + $0x10] sm:$0xff]
          %v557 = vld [vmem:[#allocation8 + $0x18] sm:$0xff]
          %v558 = vld [vmem:[#allocation8 + $0x20] sm:$0xff]
          %v559 = vld [vmem:[#allocation8 + $0x28] sm:$0xff]
          %v560 = vld [vmem:[#allocation8 + $0x30] sm:$0xff]
          %v561 = vld [vmem:[#allocation8 + $0x38] sm:$0xff]
          %v562 = vld [vmem:[#allocation8 + $0x40] sm:$0xff]
          %v563 = vld [vmem:[#allocation8 + $0x48] sm:$0xff]
          %v564 = vld [vmem:[#allocation8 + $0x50] sm:$0xff]
          %v565 = vld [vmem:[#allocation8 + $0x58] sm:$0xff]
          %v566 = vld [vmem:[#allocation8 + $0x60] sm:$0xff]
          %v567 = vld [vmem:[#allocation8 + $0x68] sm:$0xff]
          %v568 = vld [vmem:[#allocation8 + $0x70] sm:$0xff]
          %v569 = vld [vmem:[#allocation8 + $0x78] sm:$0xff]
          %v570 = vld [vmem:[%s3] sm:$0x1]
          %v572 = vlaneseq
          %v573 = vshrl.u32 %v572, 7
          %v574 = vsub.s32 0, %v573
          %v575 = vrot.slane %v570, %v574
          %577 = vmatprep.subr.mxu0 0.0
          %578 = vmatpush1.msra.mxu0 %v554
          %579 = vmatprep.subr.mxu0 0.0
          %580 = vmatpush1.msra.mxu0 %v555
          %581 = vmatprep.subr.mxu0 0.0
          %582 = vmatpush1.msra.mxu0 %v556
          %583 = vmatprep.subr.mxu0 0.0
          %584 = vmatpush1.msra.mxu0 %v557
          %585 = vmatprep.subr.mxu0 0.0
          %586 = vmatpush1.msra.mxu0 %v558
          %587 = vmatprep.subr.mxu0 0.0
          %588 = vmatpush1.msra.mxu0 %v559
          %589 = vmatprep.subr.mxu0 0.0
          %590 = vmatpush1.msra.mxu0 %v560
          %591 = vmatprep.subr.mxu0 0.0
          %592 = vmatpush1.msra.mxu0 %v561
          %593 = vmatprep.subr.mxu0 0.0
          %594 = vmatpush1.msra.mxu0 %v562
          %595 = vmatprep.subr.mxu0 0.0
          %596 = vmatpush1.msra.mxu0 %v563
          %597 = vmatprep.subr.mxu0 0.0
          %598 = vmatpush1.msra.mxu0 %v564
          %599 = vmatprep.subr.mxu0 0.0
          %600 = vmatpush1.msra.mxu0 %v565
          %601 = vmatprep.subr.mxu0 0.0
          %602 = vmatpush1.msra.mxu0 %v566
          %603 = vmatprep.subr.mxu0 0.0
          %604 = vmatpush1.msra.mxu0 %v567
          %605 = vmatprep.subr.mxu0 0.0
          %606 = vmatpush1.msra.mxu0 %v568
          %607 = vmatprep.subr.mxu0 0.0
          %608 = vmatpush1.msra.mxu0 %v569
          %609 = vmatprep.subr.mxu0 0.0
          %610 = vmatpush1.msra.mxu0 0.0
          %611 = vmatprep.subr.mxu0 0.0
          %612 = vmatpush1.msra.mxu0 0.0
          %613 = vmatprep.subr.mxu0 0.0
          %614 = vmatpush1.msra.mxu0 0.0
          %615 = vmatprep.subr.mxu0 0.0
          %616 = vmatpush1.msra.mxu0 0.0
          %617 = vmatprep.subr.mxu0 0.0
          %618 = vmatpush1.msra.mxu0 0.0
          %619 = vmatprep.subr.mxu0 0.0
          %620 = vmatpush1.msra.mxu0 0.0
          %621 = vmatprep.subr.mxu0 0.0
          %622 = vmatpush1.msra.mxu0 0.0
          %623 = vmatprep.subr.mxu0 0.0
          %624 = vmatpush1.msra.mxu0 0.0
          %625 = vmatprep.subr.mxu0 0.0
          %626 = vmatpush1.msra.mxu0 0.0
          %627 = vmatprep.subr.mxu0 0.0
          %628 = vmatpush1.msra.mxu0 0.0
          %629 = vmatprep.subr.mxu0 0.0
          %630 = vmatpush1.msra.mxu0 0.0
          %631 = vmatprep.subr.mxu0 0.0
          %632 = vmatpush1.msra.mxu0 0.0
          %633 = vmatprep.subr.mxu0 0.0
          %634 = vmatpush1.msra.mxu0 0.0
          %635 = vmatprep.subr.mxu0 0.0
          %636 = vmatpush1.msra.mxu0 0.0
          %637 = vmatprep.subr.mxu0 0.0
          %638 = vmatpush1.msra.mxu0 0.0
          %639 = vmatprep.subr.mxu0 0.0
          %640 = vmatpush1.msra.mxu0 0.0
          %641 = vmatprep.mubr.f32.mxu0 0.0
          %642 = vmatmul.mubr.f32.gmra.mrb[0].mxu0 %v538
          %v643 = vpop.f32.mrb[0].mxu0
          %v644 = vadd.f32 %v575, %v643
          %v645 = vpop.f32.mrb[0].mxu0
          %646 = vmatprep.mubr.f32.mxu0 0.0
          %647 = vmatmul.mubr.f32.gmra.mrb[0].mxu0 %v539
          %v648 = vpop.f32.mrb[0].mxu0
          %v649 = vadd.f32 %v575, %v648
          %v650 = vpop.f32.mrb[0].mxu0
          %651 = vmatprep.mubr.f32.mxu0 0.0
          %652 = vmatmul.mubr.f32.gmra.mrb[0].mxu0 %v540
          %v653 = vpop.f32.mrb[0].mxu0
          %v654 = vadd.f32 %v575, %v653
          %v655 = vpop.f32.mrb[0].mxu0
          %656 = vmatprep.mubr.f32.mxu0 0.0
          %657 = vmatmul.mubr.f32.gmra.mrb[0].mxu0 %v541
          %v658 = vpop.f32.mrb[0].mxu0
          %v659 = vadd.f32 %v575, %v658
          %v660 = vpop.f32.mrb[0].mxu0
          %661 = vmatprep.mubr.f32.mxu0 0.0
          %662 = vmatmul.mubr.f32.gmra.mrb[0].mxu0 %v542
          %v663 = vpop.f32.mrb[0].mxu0
          %v664 = vadd.f32 %v575, %v663
          %v665 = vpop.f32.mrb[0].mxu0
          %666 = vmatprep.mubr.f32.mxu0 0.0
          %667 = vmatmul.mubr.f32.gmra.mrb[0].mxu0 %v543
          %v668 = vpop.f32.mrb[0].mxu0
          %v669 = vadd.f32 %v575, %v668
          %v670 = vpop.f32.mrb[0].mxu0
          %671 = vmatprep.mubr.f32.mxu0 0.0
          %672 = vmatmul.mubr.f32.gmra.mrb[0].mxu0 %v544
          %v673 = vpop.f32.mrb[0].mxu0
          %v674 = vadd.f32 %v575, %v673
          %v675 = vpop.f32.mrb[0].mxu0
          %676 = vmatprep.mubr.f32.mxu0 0.0
          %677 = vmatmul.mubr.f32.gmra.mrb[0].mxu0 %v545
          %v678 = vpop.f32.mrb[0].mxu0
          %v679 = vadd.f32 %v575, %v678
          %v680 = vpop.f32.mrb[0].mxu0
          %681 = vmatprep.mubr.f32.mxu0 0.0
          %682 = vmatmul.mubr.f32.gmra.mrb[0].mxu0 %v546
          %v683 = vpop.f32.mrb[0].mxu0
          %v684 = vadd.f32 %v575, %v683
          %v685 = vpop.f32.mrb[0].mxu0
          %686 = vmatprep.mubr.f32.mxu0 0.0
          %687 = vmatmul.mubr.f32.gmra.mrb[0].mxu0 %v547
          %v688 = vpop.f32.mrb[0].mxu0
          %v689 = vadd.f32 %v575, %v688
          %v690 = vpop.f32.mrb[0].mxu0
          %691 = vmatprep.mubr.f32.mxu0 0.0
          %692 = vmatmul.mubr.f32.gmra.mrb[0].mxu0 %v548
          %v693 = vpop.f32.mrb[0].mxu0
          %v694 = vadd.f32 %v575, %v693
          %v695 = vpop.f32.mrb[0].mxu0
          %696 = vmatprep.mubr.f32.mxu0 0.0
          %697 = vmatmul.mubr.f32.gmra.mrb[0].mxu0 %v549
          %v698 = vpop.f32.mrb[0].mxu0
          %v699 = vadd.f32 %v575, %v698
          %v700 = vpop.f32.mrb[0].mxu0
          %701 = vmatprep.mubr.f32.mxu0 0.0
          %702 = vmatmul.mubr.f32.gmra.mrb[0].mxu0 %v550
          %v703 = vpop.f32.mrb[0].mxu0
          %v704 = vadd.f32 %v575, %v703
          %v705 = vpop.f32.mrb[0].mxu0
          %706 = vmatprep.mubr.f32.mxu0 0.0
          %707 = vmatmul.mubr.f32.gmra.mrb[0].mxu0 %v551
          %v708 = vpop.f32.mrb[0].mxu0
          %v709 = vadd.f32 %v575, %v708
          %v710 = vpop.f32.mrb[0].mxu0
          %711 = vmatprep.mubr.f32.mxu0 0.0
          %712 = vmatmul.mubr.f32.gmra.mrb[0].mxu0 %v552
          %v713 = vpop.f32.mrb[0].mxu0
          %v714 = vadd.f32 %v575, %v713
          %v715 = vpop.f32.mrb[0].mxu0
          %716 = vmatprep.mubr.f32.mxu0 0.0
          %717 = vmatmul.mubr.f32.gmra.mrb[0].mxu0 %v553
          %v718 = vpop.f32.mrb[0].mxu0
          %v719 = vadd.f32 %v575, %v718
          %v720 = vpop.f32.mrb[0].mxu0
          %721 = vdwg.mxu0
          %v722 = vtanh.pop %v644
          %v723 = vtanh.pop %v649
          %v724 = vtanh.pop %v654
          %v725 = vtanh.pop %v659
          %v726 = vtanh.pop %v664
          %v727 = vtanh.pop %v669
          %v728 = vtanh.pop %v674
          %v729 = vtanh.pop %v679
          %v730 = vtanh.pop %v684
          %v731 = vtanh.pop %v689
          %v732 = vtanh.pop %v694
          %v733 = vtanh.pop %v699
          %v734 = vtanh.pop %v704
          %v735 = vtanh.pop %v709
          %v736 = vtanh.pop %v714
          %v737 = vtanh.pop %v719
          %738 = vst [vmem:[%s285] sm:$0xff] %v722
          %739 = vst [vmem:[%s285 + $0x8] sm:$0xff] %v723
          %740 = vst [vmem:[%s285 + $0x10] sm:$0xff] %v724
          %741 = vst [vmem:[%s285 + $0x18] sm:$0xff] %v725
          %742 = vst [vmem:[%s285 + $0x20] sm:$0xff] %v726
          %743 = vst [vmem:[%s285 + $0x28] sm:$0xff] %v727
          %744 = vst [vmem:[%s285 + $0x30] sm:$0xff] %v728
          %745 = vst [vmem:[%s285 + $0x38] sm:$0xff] %v729
          %746 = vst [vmem:[%s285 + $0x40] sm:$0xff] %v730
          %747 = vst [vmem:[%s285 + $0x48] sm:$0xff] %v731
          %748 = vst [vmem:[%s285 + $0x50] sm:$0xff] %v732
          %749 = vst [vmem:[%s285 + $0x58] sm:$0xff] %v733
          %750 = vst [vmem:[%s285 + $0x60] sm:$0xff] %v734
          %751 = vst [vmem:[%s285 + $0x68] sm:$0xff] %v735
          %752 = vst [vmem:[%s285 + $0x70] sm:$0xff] %v736
          %753 = vst [vmem:[%s285 + $0x78] sm:$0xff] %v737
        $region56: #{tpu_custom_call.1} parent=35 // pred_fallthru
          _
        %s754 = sand.u32 %s140, 1
        %s755 = scalar_lea.sflag [#allocation5], %s754
        %s756 = sand.u32 %s140, 1
        %s757 = smul.addr %s756, 128
        %s758 = scalar_lea.vmem [#allocation9], %s757
        // Predicated region
        $region57: #{tpu_custom_call.1} parent=35 // pred_check
          %p759 = pneg %p150
        $region58: #{tpu_custom_call.1} parent=35 // pred_check_branch
          %761 = sbr.rel (%p759) target = $region60
        $region59: #{tpu_custom_call.1} parent=35 // pred_region
          %s762 = smul.u32 16, %s28
          %s764 = ssub.s32 2048, 2048
          %765 = vsyncadd %s755, %s764
          %s766 = smul.addr %s762, 128
          %s767 = scalar_lea.hbm %s4, %s766
          %s768 = sshll.u32 %s758, 4
          %s769 = int_to_ptr.vmem [resolvable:$true] %s768
          %774 = dma.vmem_to_hbm [thread:$0]  %s769, 2048, %s767, %s755, 128, 128, 8
        $region60: #{tpu_custom_call.1} parent=35 // pred_fallthru
          _
      $region36: #{tpu_custom_call.1} parent=5 // pred_fallthru
        _
      %p775 = scmp.le.s32.totalorder 2, %s19
      // Predicated region
      $region61: #{tpu_custom_call.1} parent=5 // pred_check
        %p776 = pneg %p775
      $region62: #{tpu_custom_call.1} parent=5 // pred_check_branch
        %778 = sbr.rel (%p776) target = $region64
      $region63: #{tpu_custom_call.1} parent=5 // pred_region
        %s779 = ssub.s32 %s19, 2
        // Predicated region
        $region65: #{tpu_custom_call.1} parent=63 // pred_check
          %p780 = pneg %p156
        $region66: #{tpu_custom_call.1} parent=63 // pred_check_branch
          %782 = sbr.rel (%p780) target = $region68
        $region67: #{tpu_custom_call.1} parent=63 // pred_region
          %s783 = sand.u32 %s141, 1
          %s784 = scalar_lea.sflag [#allocation5], %s783
          %s785 = sand.u32 %s141, 1
          %s786 = smul.addr %s785, 128
          %s787 = scalar_lea.vmem [#allocation9], %s786
          %788 = dma.done %s784, 2048
        $region68: #{tpu_custom_call.1} parent=63 // pred_fallthru
          _
      $region64: #{tpu_custom_call.1} parent=5 // pred_fallthru
        _
    $region6: #{tpu_custom_call.1} parent=1 // loop_footer
      %s23 = sadd.s32 1, %s19
    $region7: #{tpu_custom_call.1} parent=1 // loop_footer_branch
      %18 = sbr.rel target = $region3
    $region8: #{tpu_custom_call.1} parent=1 // loop_exit
      _
    %789 = vsyncpa [#allocation4], 1
    %s790 = scalar_lea.sflag [#allocation4], 1
    %791 = vsyncpa %s790, 1
    %792 = vsyncpa [#allocation7], 1
    %s793 = scalar_lea.sflag [#allocation7], 1
    %794 = vsyncpa %s793, 1
    %795 = vsyncpa [#allocation5], 1
    %s796 = scalar_lea.sflag [#allocation5], 1
    %797 = vsyncpa %s796, 1

</llo_original>
